<compile_context>
chip_gen: v6e
topology: v6e:2x2x1
jax: 0.10.0
libtpu: 0.0.40
codegen_flags: <defaults>
</compile_context>

<pallas_src>
import jax
import jax.numpy as jnp
from jax.experimental import pallas as pl
from jax.experimental.pallas import tpu as pltpu


def critic_ensemble_kernel(saT_ref, wf_ref, bf_ref, w2_ref, mb2_ref, out_ref):
    # Fused (encoder + decoder layer-1) matmul, batch on the lane axis:
    #   (E*H1, S+A) @ (S+A, TB) -> (E*H1, TB), f32 accumulation.
    z = jnp.dot(wf_ref[...], saT_ref[...], preferred_element_type=jnp.float32)
    z = jnp.maximum(z + bf_ref[...], 0.0)                       # (E*H1, TB)

    # E output heads + 1/E ensemble mean as one small MXU matmul:
    #   (1, E*H1) @ (E*H1, TB) -> lane-dense (1, TB).
    q = jnp.dot(w2_ref[...], z, preferred_element_type=jnp.float32)

    # mean(b2) is an SMEM scalar.
    out_ref[...] = q + mb2_ref[0, 0]


def _round_up(x, m):
    return ((x + m - 1) // m) * m


def fuse_params(params, mxu_dtype=jnp.bfloat16):
    """One-time algebraic folding of the PyTorch-layout parameters."""
    state_avg, state_std, we_s, we_a, be, w1, b1, w2, b2 = params
    num_ensembles, h0, h1 = w1.shape
    eh1 = num_ensembles * h1

    # Fold (x - avg) / std into the state half of the encoder.
    we_s_n = we_s / state_std.reshape(-1, 1)                    # (S, H0)
    be_n = be - (state_avg / state_std) @ we_s                  # (1, H0)
    we_sa = jnp.concatenate([we_s_n, we_a], axis=0)             # (S+A, H0)

    # Fuse the E decoder first layers into one wide matmul.
    w1f = jnp.transpose(w1, (1, 0, 2)).reshape(h0, eh1)         # (H0, E*H1)
    b1f = b1.reshape(1, eh1)                                     # (1, E*H1)

    # Fold the encoder into decoder layer 1 (exact: no nonlinearity in between).
    wf = we_sa @ w1f                                             # (S+A, E*H1)
    bf = be_n @ w1f + b1f                                        # (1, E*H1)

    # Transposed (batch-on-lanes) layout for the kernel.
    wf_t = wf.T.astype(mxu_dtype)                                # (E*H1, S+A)
    bf_col = bf.T.astype(jnp.float32)                            # (E*H1, 1)

    # Fold the (H1 -> 1) heads and the 1/E ensemble mean into one row vector.
    w2_row = (w2.reshape(1, eh1) / num_ensembles).astype(jnp.float32)  # (1, E*H1)
    mb2 = jnp.mean(b2).reshape(1, 1).astype(jnp.float32)               # (1, 1) -> SMEM

    return wf_t, bf_col, w2_row, mb2


def critic_ensemble_forward(fused_params, state, action, *, tile_b=1024):
    wf_t, bf_col, w2_row, mb2 = fused_params
    batch = state.shape[0]

    # Wrapper-side concat + transpose so batch sits on the lane axis.
    sa = jnp.concatenate([state, action], axis=1)
    saT = sa.T.astype(wf_t.dtype)                                # (S+A, B)
    sa_dim = saT.shape[0]
    eh1 = wf_t.shape[0]

    # Batch tiling: full array if small, else 128-aligned lane tiles.
    if batch <= 128:
        tb, padded = batch, batch
    else:
        # Cap at tile_b, but keep >=2 grid steps so v7x megacore can shard the grid.
        tb = max(128, min(tile_b, _round_up(pl.cdiv(batch, 2), 128)))
        padded = _round_up(batch, tb)
        if padded != batch:
            saT = jnp.pad(saT, ((0, 0), (0, padded - batch)))
    grid = (padded // tb,)

    out = pl.pallas_call(
        critic_ensemble_kernel,
        out_shape=jax.ShapeDtypeStruct((1, padded), jnp.float32),
        grid_spec=pltpu.PrefetchScalarGridSpec(
            num_scalar_prefetch=0,
            grid=grid,
            in_specs=[
                pl.BlockSpec((sa_dim, tb), lambda i: (0, i)),     # batch-on-lane input tile
                pl.BlockSpec((eh1, sa_dim), lambda i: (0, 0)),    # VMEM-resident fused weights
                pl.BlockSpec((eh1, 1), lambda i: (0, 0)),         # fused bias (column)
                pl.BlockSpec((1, eh1), lambda i: (0, 0)),         # heads + 1/E row vector
                pl.BlockSpec(memory_space=pltpu.MemorySpace.SMEM),  # mean(b2) scalar
            ],
            out_specs=pl.BlockSpec((1, tb), lambda i: (0, i)),    # lane-dense output row
        ),
        compiler_params=pltpu.CompilerParams(
            dimension_semantics=("parallel",)),                   # megacore sharding on v7x
    )(saT, wf_t, bf_col, w2_row, mb2)

    # (1, padded) -> (batch, 1)
    return out.reshape(padded, 1)[:batch]


def init_params(key, state_dim, action_dim, net_dims, num_ensembles):
    # Decoder structure assumes len(net_dims) == 2: Linear(H0,H1) -> ReLU -> Linear(H1,1).
    assert len(net_dims) == 2, "this kernel implements the 2-layer decoder case"
    h0, h1 = net_dims
    ks = jax.random.split(key, 8)

    # Running stats (zeros/ones right after init in the module; non-trivial here so the
    # normalization fold is actually exercised).
    state_avg = jax.random.normal(ks[6], (1, state_dim), jnp.float32) * 0.1
    state_std = jnp.abs(jax.random.normal(ks[7], (1, state_dim), jnp.float32)) + 0.5

    # Encoder Linear(state_dim + action_dim, h0), split into state/action halves,
    # stored transposed (in, out).
    we_s = jax.random.normal(ks[0], (state_dim, h0), jnp.float32) * 0.1
    we_a = jax.random.normal(ks[1], (action_dim, h0), jnp.float32) * 0.1
    be = jax.random.normal(ks[2], (1, h0), jnp.float32) * 0.01

    # Per-ensemble decoder weights (synthetic init; the PyTorch orthogonal init is not
    # reproduced bit-for-bit, only shapes/semantics of the forward pass).
    w1 = jax.random.normal(ks[3], (num_ensembles, h0, h1), jnp.float32) * 0.1
    b1 = jax.random.normal(ks[4], (num_ensembles, 1, h1), jnp.float32) * 0.01
    w2 = jax.random.normal(ks[5], (num_ensembles, h1, 1), jnp.float32) * 0.5
    b2 = jnp.full((1, num_ensembles), 1e-6, jnp.float32)        # bias_const=1e-6

    return (state_avg, state_std, we_s, we_a, be, w1, b1, w2, b2)


def reference_forward(params, state, action):
    state_avg, state_std, we_s, we_a, be, w1, b1, w2, b2 = params
    s = (state - state_avg) / state_std
    h = s @ we_s + action @ we_a + be                                    # (B, H0)
    hid = jnp.maximum(jnp.einsum('bh,ehk->ebk', h, w1) + b1, 0.0)        # (E, B, H1)
    q = jnp.einsum('ebk,eko->ebo', hid, w2)[..., 0].T + b2               # (B, E)
    return jnp.mean(q, axis=-1, keepdims=True)                           # (B, 1)


if __name__ == "__main__":
    state_dim, action_dim = 16, 8
    net_dims = (32, 32)
    num_ensembles = 8

    key = jax.random.PRNGKey(0)
    k_params, k_state, k_action = jax.random.split(key, 3)
    params = init_params(k_params, state_dim, action_dim, net_dims, num_ensembles)
    fused = fuse_params(params)          # bf16 MXU operands, f32 accumulation

    # Small batch: single grid step (full-array tiles).
    batch = 8
    state = jax.random.normal(k_state, (batch, state_dim), jnp.float32)
    action = jax.random.normal(k_action, (batch, action_dim), jnp.float32)
    out = jax.block_until_ready(critic_ensemble_forward(fused, state, action))
    ref = reference_forward(params, state, action)
    assert out.shape == (batch, 1)
    # bf16 MXU operands -> tolerance loosened vs the f32 reference.
    assert jnp.allclose(out, ref, atol=2e-2, rtol=2e-2), (out, ref)

    # Larger batch: exercises lane-aligned batch tiles, padding, >=2-step grid.
    batch2 = 1000
    k_state2, k_action2 = jax.random.split(jax.random.PRNGKey(1))
    state2 = jax.random.normal(k_state2, (batch2, state_dim), jnp.float32)
    action2 = jax.random.normal(k_action2, (batch2, action_dim), jnp.float32)
    out2 = jax.block_until_ready(critic_ensemble_forward(fused, state2, action2))
    ref2 = reference_forward(params, state2, action2)
    assert out2.shape == (batch2, 1)
    assert jnp.allclose(out2, ref2, atol=2e-2, rtol=2e-2)

    print("KERNEL_OK")
</pallas_src>

<mosaic_0001>
module attributes {stable_mosaic.version = 11 : i64} {
  func.func @critic_ensemble_kernel(%arg0: i32, %arg1: memref<24x8xbf16, #tpu.memory_space<vmem>>, %arg2: memref<256x24xbf16, #tpu.memory_space<vmem>>, %arg3: memref<256x1xf32, #tpu.memory_space<vmem>>, %arg4: memref<1x256xf32, #tpu.memory_space<vmem>>, %arg5: memref<1x1xf32, #tpu.memory_space<smem>>, %arg6: memref<1x8xf32, #tpu.memory_space<vmem>>) attributes {dimension_semantics = [#tpu.dimension_semantics<parallel>], iteration_bounds = array<i64: 1>, scalar_prefetch = 0 : i64, scratch_operands = 0 : i64, tpu.core_type = #tpu.core_type<tc>, window_params = [{transform_indices = @transform_0, window_bounds = array<i64: 24, 8>}, {pipeline_mode = #tpu.pipeline_mode<synchronous>, transform_indices = @transform_1, window_bounds = array<i64: 256, 24>}, {pipeline_mode = #tpu.pipeline_mode<synchronous>, transform_indices = @transform_2, window_bounds = array<i64: 256, 1>}, {pipeline_mode = #tpu.pipeline_mode<synchronous>, transform_indices = @transform_3, window_bounds = array<i64: 1, 256>}, {transform_indices = @transform_4, window_bounds = array<i64: 1, 1>}, {transform_indices = @transform_5, window_bounds = array<i64: 1, 8>}]} {
    %c0 = arith.constant 0 : index
    %c0_0 = arith.constant 0 : index
    %0 = vector.load %arg2[%c0, %c0_0] : memref<256x24xbf16, #tpu.memory_space<vmem>>, vector<256x24xbf16>
    %c0_1 = arith.constant 0 : index
    %c0_2 = arith.constant 0 : index
    %1 = vector.load %arg1[%c0_1, %c0_2] : memref<24x8xbf16, #tpu.memory_space<vmem>>, vector<24x8xbf16>
    %cst = arith.constant dense<0.000000e+00> : vector<256x8xf32>
    %2 = tpu.matmul %0, %1, %cst {dimension_numbers = #tpu.dot_dimension_numbers<[1], [0], [0], [1], [0, 0, 1, 1], [], []>} : vector<256x24xbf16>, vector<24x8xbf16>, vector<256x8xf32> -> vector<256x8xf32>
    %c0_3 = arith.constant 0 : index
    %c0_4 = arith.constant 0 : index
    %3 = vector.load %arg3[%c0_3, %c0_4] : memref<256x1xf32, #tpu.memory_space<vmem>>, vector<256x1xf32>
    %4 = vector.broadcast %3 : vector<256x1xf32> to vector<256x8xf32>
    %5 = arith.addf %2, %4 : vector<256x8xf32>
    %cst_5 = arith.constant 0.000000e+00 : f32
    %6 = vector.broadcast %cst_5 : f32 to vector<256x8xf32>
    %7 = arith.maximumf %5, %6 : vector<256x8xf32>
    %c0_6 = arith.constant 0 : index
    %c0_7 = arith.constant 0 : index
    %8 = vector.load %arg4[%c0_6, %c0_7] : memref<1x256xf32, #tpu.memory_space<vmem>>, vector<1x256xf32>
    %cst_8 = arith.constant dense<0.000000e+00> : vector<1x8xf32>
    %9 = tpu.matmul %8, %7, %cst_8 {dimension_numbers = #tpu.dot_dimension_numbers<[1], [0], [0], [1], [0, 0, 1, 1], [], []>} : vector<1x256xf32>, vector<256x8xf32>, vector<1x8xf32> -> vector<1x8xf32>
    %c0_9 = arith.constant 0 : index
    %c0_10 = arith.constant 0 : index
    %10 = memref.load %arg5[%c0_9, %c0_10] : memref<1x1xf32, #tpu.memory_space<smem>>
    %11 = vector.broadcast %10 : f32 to vector<1x8xf32>
    %12 = arith.addf %9, %11 : vector<1x8xf32>
    %c0_11 = arith.constant 0 : index
    %c0_12 = arith.constant 0 : index
    %13 = vector.load %arg6[%c0_11, %c0_12] : memref<1x8xf32, #tpu.memory_space<vmem>>, vector<1x8xf32>
    tpu.vector_store %arg6[%c0_11, %c0_12], %12 {strides = array<i32>} : memref<1x8xf32, #tpu.memory_space<vmem>>, vector<1x8xf32>,
    return
  }
  func.func @transform_0(%arg0: i32) -> (i32, i32) {
    %c0_i32 = arith.constant 0 : i32
    %c0_i32_0 = arith.constant 0 : i32
    return %c0_i32, %arg0 : i32, i32
  }
  func.func @transform_1(%arg0: i32) -> (i32, i32) {
    %c0_i32 = arith.constant 0 : i32
    %c0_i32_0 = arith.constant 0 : i32
    %c0_i32_1 = arith.constant 0 : i32
    return %c0_i32, %c0_i32_0 : i32, i32
  }
  func.func @transform_2(%arg0: i32) -> (i32, i32) {
    %c0_i32 = arith.constant 0 : i32
    %c0_i32_0 = arith.constant 0 : i32
    %c0_i32_1 = arith.constant 0 : i32
    return %c0_i32, %c0_i32_0 : i32, i32
  }
  func.func @transform_3(%arg0: i32) -> (i32, i32) {
    %c0_i32 = arith.constant 0 : i32
    %c0_i32_0 = arith.constant 0 : i32
    %c0_i32_1 = arith.constant 0 : i32
    return %c0_i32, %c0_i32_0 : i32, i32
  }
  func.func @transform_4(%arg0: i32) -> (i32, i32) {
    %c0_i32 = arith.constant 0 : i32
    %c0_i32_0 = arith.constant 0 : i32
    %c0_i32_1 = arith.constant 0 : i32
    return %c0_i32, %c0_i32_0 : i32, i32
  }
  func.func @transform_5(%arg0: i32) -> (i32, i32) {
    %c0_i32 = arith.constant 0 : i32
    %c0_i32_0 = arith.constant 0 : i32
    return %c0_i32, %arg0 : i32, i32
  }
}

</mosaic_0001>

<llo_original>
// kernel: tpu_custom_call.1
$region0: #{tpu_custom_call.1}
  #allocation0 [shape = 'u32[]', space=smem, size = 0x4, offset = 0x4, fixed_abs, tag = 'smem constant byte address 0x4 - core index']
  #allocation1 [shape = 'u32[144,128]{1,0:T(1,128)}', space=vmem, size = 0x12000, scoped, tag = 'internal scratch']
  #allocation2 [shape = 'f32[1,1]{1,0:T(1,128)S(6)}', space=smem, size = 0x200, scoped, tag = 'scoped memory for tpu_custom_call.1']
  %s0 = inlined_call_operand.vmem [shape: bf16[24,8], index: 0, kind: input, shape index: {}]
  %s1 = inlined_call_operand.vmem [shape: bf16[256,24], index: 1, kind: input, shape index: {}]
  %s2 = inlined_call_operand.vmem [shape: f32[256,1], index: 2, kind: input, shape index: {}]
  %s3 = inlined_call_operand.vmem [shape: f32[1,256], index: 3, kind: input, shape index: {}]
  %s4 = inlined_call_operand.<no memory space> [shape: f32[1,1], index: 4, kind: input, shape index: {}]
  %s5 = inlined_call_operand.hbm [shape: f32[1,8], index: 5, kind: output, shape index: {}]
  %s6 = sld [smem:[#allocation0]]
  $region30: #{tpu_custom_call.1} parent=0
    _
  %s8 = ssub.s32 1, %s6
  %s9 = scalar_select 0, %s8, %s6
  %10 = sst [smem:[#allocation2]] %s4
  $region1: #{tpu_custom_call.1} parent=0
    #allocation3 [shape = 'u8[512]{0}', space=vmem, size = 0x400, scoped, tag = 'output window, operand 0, single buffered']
    #allocation4 [shape = 's32[1]{0}', space=sflag, size = 0x4, scoped, tag = 'scoped memory for tpu_custom_call.1']
    %11 = vsyncpa [#allocation4], 0
    // Predicated region
    $region2: #{tpu_custom_call.1} parent=1 // pred_check
      _
    $region3: #{tpu_custom_call.1} parent=1 // pred_check_branch
      %13 = sbr.rel (0) target = $region5
    $region4: #{tpu_custom_call.1} parent=1 // pred_region
      _
    $region5: #{tpu_custom_call.1} parent=1 // pred_fallthru
      _
    // Predicated region
    $region6: #{tpu_custom_call.1} parent=1 // pred_check
      _
    $region7: #{tpu_custom_call.1} parent=1 // pred_check_branch
      %15 = sbr.rel (0) target = $region9
    $region8: #{tpu_custom_call.1} parent=1 // pred_region
      _
    $region9: #{tpu_custom_call.1} parent=1 // pred_fallthru
      _
    // Predicated region
    $region10: #{tpu_custom_call.1} parent=1 // pred_check
      _
    $region11: #{tpu_custom_call.1} parent=1 // pred_check_branch
      %17 = sbr.rel (0) target = $region13
    $region12: #{tpu_custom_call.1} parent=1 // pred_region
      _
    $region13: #{tpu_custom_call.1} parent=1 // pred_fallthru
      _
    // Predicated region
    $region14: #{tpu_custom_call.1} parent=1 // pred_check
      _
    $region15: #{tpu_custom_call.1} parent=1 // pred_check_branch
      %19 = sbr.rel (0) target = $region17
    $region16: #{tpu_custom_call.1} parent=1 // pred_region
      _
    $region17: #{tpu_custom_call.1} parent=1 // pred_fallthru
      _
    // Predicated region
    $region18: #{tpu_custom_call.1} parent=1 // pred_check
      _
    $region19: #{tpu_custom_call.1} parent=1 // pred_check_branch
      %21 = sbr.rel (0) target = $region21
    $region20: #{tpu_custom_call.1} parent=1 // pred_region
      _
    $region21: #{tpu_custom_call.1} parent=1 // pred_fallthru
      _
    %v23 = vld [vmem:[%s1] sm:$0xf]
    %v24 = vld [vmem:[%s1 + $0x4] sm:$0xf]
    %v25 = vld [vmem:[%s1 + $0x8] sm:$0xf]
    %v26 = vld [vmem:[%s1 + $0xc] sm:$0xf]
    %v27 = vld [vmem:[%s1 + $0x10] sm:$0xf]
    %v28 = vld [vmem:[%s1 + $0x14] sm:$0xf]
    %v29 = vld [vmem:[%s1 + $0x18] sm:$0xf]
    %v30 = vld [vmem:[%s1 + $0x1c] sm:$0xf]
    %v31 = vld [vmem:[%s1 + $0x20] sm:$0xf]
    %v32 = vld [vmem:[%s1 + $0x24] sm:$0xf]
    %v33 = vld [vmem:[%s1 + $0x28] sm:$0xf]
    %v34 = vld [vmem:[%s1 + $0x2c] sm:$0xf]
    %v35 = vld [vmem:[%s1 + $0x30] sm:$0xf]
    %v36 = vld [vmem:[%s1 + $0x34] sm:$0xf]
    %v37 = vld [vmem:[%s1 + $0x38] sm:$0xf]
    %v38 = vld [vmem:[%s1 + $0x3c] sm:$0xf]
    %v39 = vld [vmem:[%s1 + $0x40] sm:$0xf]
    %v40 = vld [vmem:[%s1 + $0x44] sm:$0xf]
    %v41 = vld [vmem:[%s1 + $0x48] sm:$0xf]
    %v42 = vld [vmem:[%s1 + $0x4c] sm:$0xf]
    %v43 = vld [vmem:[%s1 + $0x50] sm:$0xf]
    %v44 = vld [vmem:[%s1 + $0x54] sm:$0xf]
    %v45 = vld [vmem:[%s1 + $0x58] sm:$0xf]
    %v46 = vld [vmem:[%s1 + $0x5c] sm:$0xf]
    %v47 = vld [vmem:[%s1 + $0x60] sm:$0xf]
    %v48 = vld [vmem:[%s1 + $0x64] sm:$0xf]
    %v49 = vld [vmem:[%s1 + $0x68] sm:$0xf]
    %v50 = vld [vmem:[%s1 + $0x6c] sm:$0xf]
    %v51 = vld [vmem:[%s1 + $0x70] sm:$0xf]
    %v52 = vld [vmem:[%s1 + $0x74] sm:$0xf]
    %v53 = vld [vmem:[%s1 + $0x78] sm:$0xf]
    %v54 = vld [vmem:[%s1 + $0x7c] sm:$0xf]
    %v55 = vld [vmem:[%s0] sm:$0xf]
    %v56 = vld [vmem:[%s0 + $0x4] sm:$0xf]
    %v57 = vld [vmem:[%s0 + $0x8] sm:$0xf]
    %v58 = vld [vmem:[%s2] sm:$0xff]
    %v59 = vld [vmem:[%s2 + $0x8] sm:$0xff]
    %v60 = vld [vmem:[%s2 + $0x10] sm:$0xff]
    %v61 = vld [vmem:[%s2 + $0x18] sm:$0xff]
    %v62 = vld [vmem:[%s2 + $0x20] sm:$0xff]
    %v63 = vld [vmem:[%s2 + $0x28] sm:$0xff]
    %v64 = vld [vmem:[%s2 + $0x30] sm:$0xff]
    %v65 = vld [vmem:[%s2 + $0x38] sm:$0xff]
    %v66 = vld [vmem:[%s2 + $0x40] sm:$0xff]
    %v67 = vld [vmem:[%s2 + $0x48] sm:$0xff]
    %v68 = vld [vmem:[%s2 + $0x50] sm:$0xff]
    %v69 = vld [vmem:[%s2 + $0x58] sm:$0xff]
    %v70 = vld [vmem:[%s2 + $0x60] sm:$0xff]
    %v71 = vld [vmem:[%s2 + $0x68] sm:$0xff]
    %v72 = vld [vmem:[%s2 + $0x70] sm:$0xff]
    %v73 = vld [vmem:[%s2 + $0x78] sm:$0xff]
    %v74 = vld [vmem:[%s2 + $0x80] sm:$0xff]
    %v75 = vld [vmem:[%s2 + $0x88] sm:$0xff]
    %v76 = vld [vmem:[%s2 + $0x90] sm:$0xff]
    %v77 = vld [vmem:[%s2 + $0x98] sm:$0xff]
    %v78 = vld [vmem:[%s2 + $0xa0] sm:$0xff]
    %v79 = vld [vmem:[%s2 + $0xa8] sm:$0xff]
    %v80 = vld [vmem:[%s2 + $0xb0] sm:$0xff]
    %v81 = vld [vmem:[%s2 + $0xb8] sm:$0xff]
    %v82 = vld [vmem:[%s2 + $0xc0] sm:$0xff]
    %v83 = vld [vmem:[%s2 + $0xc8] sm:$0xff]
    %v84 = vld [vmem:[%s2 + $0xd0] sm:$0xff]
    %v85 = vld [vmem:[%s2 + $0xd8] sm:$0xff]
    %v86 = vld [vmem:[%s2 + $0xe0] sm:$0xff]
    %v87 = vld [vmem:[%s2 + $0xe8] sm:$0xff]
    %v88 = vld [vmem:[%s2 + $0xf0] sm:$0xff]
    %v89 = vld [vmem:[%s2 + $0xf8] sm:$0xff]
    %91 = vset.pattern.permute.xlu0 0
    %92 = vperm.xlu0 %91, %v58
    %v93 = vpop.permute.xlu0 %92
    %96 = vset.pattern.permute.xlu0 0
    %97 = vperm.xlu0 %96, %v59
    %v98 = vpop.permute.xlu0 %97
    %101 = vset.pattern.permute.xlu0 0
    %102 = vperm.xlu0 %101, %v60
    %v103 = vpop.permute.xlu0 %102
    %106 = vset.pattern.permute.xlu0 0
    %107 = vperm.xlu0 %106, %v61
    %v108 = vpop.permute.xlu0 %107
    %111 = vset.pattern.permute.xlu0 0
    %112 = vperm.xlu0 %111, %v62
    %v113 = vpop.permute.xlu0 %112
    %116 = vset.pattern.permute.xlu0 0
    %117 = vperm.xlu0 %116, %v63
    %v118 = vpop.permute.xlu0 %117
    %121 = vset.pattern.permute.xlu0 0
    %122 = vperm.xlu0 %121, %v64
    %v123 = vpop.permute.xlu0 %122
    %126 = vset.pattern.permute.xlu0 0
    %127 = vperm.xlu0 %126, %v65
    %v128 = vpop.permute.xlu0 %127
    %131 = vset.pattern.permute.xlu0 0
    %132 = vperm.xlu0 %131, %v66
    %v133 = vpop.permute.xlu0 %132
    %136 = vset.pattern.permute.xlu0 0
    %137 = vperm.xlu0 %136, %v67
    %v138 = vpop.permute.xlu0 %137
    %141 = vset.pattern.permute.xlu0 0
    %142 = vperm.xlu0 %141, %v68
    %v143 = vpop.permute.xlu0 %142
    %146 = vset.pattern.permute.xlu0 0
    %147 = vperm.xlu0 %146, %v69
    %v148 = vpop.permute.xlu0 %147
    %151 = vset.pattern.permute.xlu0 0
    %152 = vperm.xlu0 %151, %v70
    %v153 = vpop.permute.xlu0 %152
    %156 = vset.pattern.permute.xlu0 0
    %157 = vperm.xlu0 %156, %v71
    %v158 = vpop.permute.xlu0 %157
    %161 = vset.pattern.permute.xlu0 0
    %162 = vperm.xlu0 %161, %v72
    %v163 = vpop.permute.xlu0 %162
    %166 = vset.pattern.permute.xlu0 0
    %167 = vperm.xlu0 %166, %v73
    %v168 = vpop.permute.xlu0 %167
    %171 = vset.pattern.permute.xlu0 0
    %172 = vperm.xlu0 %171, %v74
    %v173 = vpop.permute.xlu0 %172
    %176 = vset.pattern.permute.xlu0 0
    %177 = vperm.xlu0 %176, %v75
    %v178 = vpop.permute.xlu0 %177
    %181 = vset.pattern.permute.xlu0 0
    %182 = vperm.xlu0 %181, %v76
    %v183 = vpop.permute.xlu0 %182
    %186 = vset.pattern.permute.xlu0 0
    %187 = vperm.xlu0 %186, %v77
    %v188 = vpop.permute.xlu0 %187
    %191 = vset.pattern.permute.xlu0 0
    %192 = vperm.xlu0 %191, %v78
    %v193 = vpop.permute.xlu0 %192
    %196 = vset.pattern.permute.xlu0 0
    %197 = vperm.xlu0 %196, %v79
    %v198 = vpop.permute.xlu0 %197
    %201 = vset.pattern.permute.xlu0 0
    %202 = vperm.xlu0 %201, %v80
    %v203 = vpop.permute.xlu0 %202
    %206 = vset.pattern.permute.xlu0 0
    %207 = vperm.xlu0 %206, %v81
    %v208 = vpop.permute.xlu0 %207
    %211 = vset.pattern.permute.xlu0 0
    %212 = vperm.xlu0 %211, %v82
    %v213 = vpop.permute.xlu0 %212
    %216 = vset.pattern.permute.xlu0 0
    %217 = vperm.xlu0 %216, %v83
    %v218 = vpop.permute.xlu0 %217
    %221 = vset.pattern.permute.xlu0 0
    %222 = vperm.xlu0 %221, %v84
    %v223 = vpop.permute.xlu0 %222
    %226 = vset.pattern.permute.xlu0 0
    %227 = vperm.xlu0 %226, %v85
    %v228 = vpop.permute.xlu0 %227
    %231 = vset.pattern.permute.xlu0 0
    %232 = vperm.xlu0 %231, %v86
    %v233 = vpop.permute.xlu0 %232
    %236 = vset.pattern.permute.xlu0 0
    %237 = vperm.xlu0 %236, %v87
    %v238 = vpop.permute.xlu0 %237
    %241 = vset.pattern.permute.xlu0 0
    %242 = vperm.xlu0 %241, %v88
    %v243 = vpop.permute.xlu0 %242
    %246 = vset.pattern.permute.xlu0 0
    %247 = vperm.xlu0 %246, %v89
    %v248 = vpop.permute.xlu0 %247
    %v282 = vunpack.c.l.b16 %v23
    %v283 = vunpack.c.l.b16 %v24
    %v284 = vunpack.c.l.b16 %v25
    %v285 = vunpack.c.l.b16 %v26
    %v286 = vunpack.c.l.b16 %v27
    %v287 = vunpack.c.l.b16 %v28
    %v288 = vunpack.c.l.b16 %v29
    %v289 = vunpack.c.l.b16 %v30
    %v290 = vunpack.c.l.b16 %v31
    %v291 = vunpack.c.l.b16 %v32
    %v292 = vunpack.c.l.b16 %v33
    %v293 = vunpack.c.l.b16 %v34
    %v294 = vunpack.c.l.b16 %v35
    %v295 = vunpack.c.l.b16 %v36
    %v296 = vunpack.c.l.b16 %v37
    %v297 = vunpack.c.l.b16 %v38
    %v298 = vunpack.c.l.b16 %v39
    %v299 = vunpack.c.l.b16 %v40
    %v300 = vunpack.c.l.b16 %v41
    %v301 = vunpack.c.l.b16 %v42
    %v302 = vunpack.c.l.b16 %v43
    %v303 = vunpack.c.l.b16 %v44
    %v304 = vunpack.c.l.b16 %v45
    %v305 = vunpack.c.l.b16 %v46
    %v306 = vunpack.c.l.b16 %v47
    %v307 = vunpack.c.l.b16 %v48
    %v308 = vunpack.c.l.b16 %v49
    %v309 = vunpack.c.l.b16 %v50
    %v310 = vunpack.c.l.b16 %v51
    %v311 = vunpack.c.l.b16 %v52
    %v312 = vunpack.c.l.b16 %v53
    %v313 = vunpack.c.l.b16 %v54
    %v314 = vpack.c.b16 %v283, %v282
    %v315 = vpack.c.b16 %v285, %v284
    %v316 = vpack.c.b16 %v287, %v286
    %v317 = vpack.c.b16 %v289, %v288
    %v318 = vpack.c.b16 %v291, %v290
    %v319 = vpack.c.b16 %v293, %v292
    %v320 = vpack.c.b16 %v295, %v294
    %v321 = vpack.c.b16 %v297, %v296
    %v322 = vpack.c.b16 %v299, %v298
    %v323 = vpack.c.b16 %v301, %v300
    %v324 = vpack.c.b16 %v303, %v302
    %v325 = vpack.c.b16 %v305, %v304
    %v326 = vpack.c.b16 %v307, %v306
    %v327 = vpack.c.b16 %v309, %v308
    %v328 = vpack.c.b16 %v311, %v310
    %v329 = vpack.c.b16 %v313, %v312
    %v333 = vunpack.c.l.b16 %v55
    %v334 = vunpack.c.l.b16 %v56
    %v335 = vunpack.c.l.b16 %v57
    %v336 = vpack.c.b16 %v334, %v333
    %v337 = vpack.c.b16 %v335, %v335
    %vm339 = vcmask 195584
    %v341 = vsel %vm339, %v314, 0
    %v344 = vsel %vm339, %v315, 0
    %v347 = vsel %vm339, %v316, 0
    %v350 = vsel %vm339, %v317, 0
    %v353 = vsel %vm339, %v318, 0
    %v356 = vsel %vm339, %v319, 0
    %v359 = vsel %vm339, %v320, 0
    %v362 = vsel %vm339, %v321, 0
    %v365 = vsel %vm339, %v322, 0
    %v368 = vsel %vm339, %v323, 0
    %v371 = vsel %vm339, %v324, 0
    %v374 = vsel %vm339, %v325, 0
    %v377 = vsel %vm339, %v326, 0
    %v380 = vsel %vm339, %v327, 0
    %v383 = vsel %vm339, %v328, 0
    %v386 = vsel %vm339, %v329, 0
    %vm388 = vcmask 1043456
    %v390 = vsel %vm388, %v337, 0
    %392 = vmatprep.subr.bf16.mxu0 0
    %393 = vmatpush1.bf16.msra.mxu0 0
    %394 = vmatprep.subr.bf16.mxu0 0
    %395 = vmatpush1.bf16.msra.mxu0 0
    %396 = vmatprep.subr.bf16.mxu0 0
    %397 = vmatpush1.bf16.msra.mxu0 0
    %398 = vmatprep.subr.bf16.mxu0 0
    %399 = vmatpush1.bf16.msra.mxu0 0
    %400 = vmatprep.subr.bf16.mxu0 0
    %401 = vmatpush1.bf16.msra.mxu0 0
    %402 = vmatprep.subr.bf16.mxu0 0
    %403 = vmatpush1.bf16.msra.mxu0 0
    %404 = vmatprep.subr.bf16.mxu0 0
    %405 = vmatpush1.bf16.msra.mxu0 %v390
    %406 = vmatprep.subr.bf16.mxu0 0
    %407 = vmatpush1.bf16.msra.mxu0 %v336
    %408 = vmatprep.subr.bf16.mxu0 0
    %409 = vmatpush2.bf16.msra.mxu0 0
    %410 = vmatprep.subr.bf16.mxu0 0
    %411 = vmatpush2.bf16.msra.mxu0 0
    %412 = vmatprep.subr.bf16.mxu0 0
    %413 = vmatpush2.bf16.msra.mxu0 0
    %414 = vmatprep.subr.bf16.mxu0 0
    %415 = vmatpush2.bf16.msra.mxu0 0
    %416 = vmatprep.subr.bf16.mxu0 0
    %417 = vmatpush2.bf16.msra.mxu0 0
    %418 = vmatprep.subr.bf16.mxu0 0
    %419 = vmatpush2.bf16.msra.mxu0 0
    %420 = vmatprep.subr.bf16.mxu0 0
    %421 = vmatpush2.bf16.msra.mxu0 0
    %422 = vmatprep.subr.bf16.mxu0 0
    %423 = vmatpush2.bf16.msra.mxu0 0
    %424 = vmatprep.mubr.bf16.mxu0 0
    %425 = vmatmul.mubr.bf16.gmra.mxu0 %v341
    %v426 = vpop.f32.mrf.mxu0
    %v427 = vadd.f32 %v93, %v426
    %v428 = vpop.f32.mrf.mxu0
    %v429 = vpop.f32.mrf.mxu0
    %v430 = vadd.f32 %v98, %v429
    %v431 = vpop.f32.mrf.mxu0
    %432 = vmatprep.mubr.bf16.mxu0 0
    %433 = vmatmul.mubr.bf16.gmra.mxu0 %v344
    %v434 = vpop.f32.mrf.mxu0
    %v435 = vadd.f32 %v103, %v434
    %v436 = vpop.f32.mrf.mxu0
    %v437 = vpop.f32.mrf.mxu0
    %v438 = vadd.f32 %v108, %v437
    %v439 = vpop.f32.mrf.mxu0
    %440 = vmatprep.mubr.bf16.mxu0 0
    %441 = vmatmul.mubr.bf16.gmra.mxu0 %v347
    %v442 = vpop.f32.mrf.mxu0
    %v443 = vadd.f32 %v113, %v442
    %v444 = vpop.f32.mrf.mxu0
    %v445 = vpop.f32.mrf.mxu0
    %v446 = vadd.f32 %v118, %v445
    %v447 = vpop.f32.mrf.mxu0
    %448 = vmatprep.mubr.bf16.mxu0 0
    %449 = vmatmul.mubr.bf16.gmra.mxu0 %v350
    %v450 = vpop.f32.mrf.mxu0
    %v451 = vadd.f32 %v123, %v450
    %v452 = vpop.f32.mrf.mxu0
    %v453 = vpop.f32.mrf.mxu0
    %v454 = vadd.f32 %v128, %v453
    %v455 = vpop.f32.mrf.mxu0
    %456 = vmatprep.mubr.bf16.mxu0 0
    %457 = vmatmul.mubr.bf16.gmra.mxu0 %v353
    %v458 = vpop.f32.mrf.mxu0
    %v459 = vadd.f32 %v133, %v458
    %v460 = vpop.f32.mrf.mxu0
    %v461 = vpop.f32.mrf.mxu0
    %v462 = vadd.f32 %v138, %v461
    %v463 = vpop.f32.mrf.mxu0
    %464 = vmatprep.mubr.bf16.mxu0 0
    %465 = vmatmul.mubr.bf16.gmra.mxu0 %v356
    %v466 = vpop.f32.mrf.mxu0
    %v467 = vadd.f32 %v143, %v466
    %v468 = vpop.f32.mrf.mxu0
    %v469 = vpop.f32.mrf.mxu0
    %v470 = vadd.f32 %v148, %v469
    %v471 = vpop.f32.mrf.mxu0
    %472 = vmatprep.mubr.bf16.mxu0 0
    %473 = vmatmul.mubr.bf16.gmra.mxu0 %v359
    %v474 = vpop.f32.mrf.mxu0
    %v475 = vadd.f32 %v153, %v474
    %v476 = vpop.f32.mrf.mxu0
    %v477 = vpop.f32.mrf.mxu0
    %v478 = vadd.f32 %v158, %v477
    %v479 = vpop.f32.mrf.mxu0
    %480 = vmatprep.mubr.bf16.mxu0 0
    %481 = vmatmul.mubr.bf16.gmra.mxu0 %v362
    %v482 = vpop.f32.mrf.mxu0
    %v483 = vadd.f32 %v163, %v482
    %v484 = vpop.f32.mrf.mxu0
    %v485 = vpop.f32.mrf.mxu0
    %v486 = vadd.f32 %v168, %v485
    %v487 = vpop.f32.mrf.mxu0
    %488 = vmatprep.mubr.bf16.mxu0 0
    %489 = vmatmul.mubr.bf16.gmra.mxu0 %v365
    %v490 = vpop.f32.mrf.mxu0
    %v491 = vadd.f32 %v173, %v490
    %v492 = vpop.f32.mrf.mxu0
    %v493 = vpop.f32.mrf.mxu0
    %v494 = vadd.f32 %v178, %v493
    %v495 = vpop.f32.mrf.mxu0
    %496 = vmatprep.mubr.bf16.mxu0 0
    %497 = vmatmul.mubr.bf16.gmra.mxu0 %v368
    %v498 = vpop.f32.mrf.mxu0
    %v499 = vadd.f32 %v183, %v498
    %v500 = vpop.f32.mrf.mxu0
    %v501 = vpop.f32.mrf.mxu0
    %v502 = vadd.f32 %v188, %v501
    %v503 = vpop.f32.mrf.mxu0
    %504 = vmatprep.mubr.bf16.mxu0 0
    %505 = vmatmul.mubr.bf16.gmra.mxu0 %v371
    %v506 = vpop.f32.mrf.mxu0
    %v507 = vadd.f32 %v193, %v506
    %v508 = vpop.f32.mrf.mxu0
    %v509 = vpop.f32.mrf.mxu0
    %v510 = vadd.f32 %v198, %v509
    %v511 = vpop.f32.mrf.mxu0
    %512 = vmatprep.mubr.bf16.mxu0 0
    %513 = vmatmul.mubr.bf16.gmra.mxu0 %v374
    %v514 = vpop.f32.mrf.mxu0
    %v515 = vadd.f32 %v203, %v514
    %v516 = vpop.f32.mrf.mxu0
    %v517 = vpop.f32.mrf.mxu0
    %v518 = vadd.f32 %v208, %v517
    %v519 = vpop.f32.mrf.mxu0
    %520 = vmatprep.mubr.bf16.mxu0 0
    %521 = vmatmul.mubr.bf16.gmra.mxu0 %v377
    %v522 = vpop.f32.mrf.mxu0
    %v523 = vadd.f32 %v213, %v522
    %v524 = vpop.f32.mrf.mxu0
    %v525 = vpop.f32.mrf.mxu0
    %v526 = vadd.f32 %v218, %v525
    %v527 = vpop.f32.mrf.mxu0
    %528 = vmatprep.mubr.bf16.mxu0 0
    %529 = vmatmul.mubr.bf16.gmra.mxu0 %v380
    %v530 = vpop.f32.mrf.mxu0
    %v531 = vadd.f32 %v223, %v530
    %v532 = vpop.f32.mrf.mxu0
    %v533 = vpop.f32.mrf.mxu0
    %v534 = vadd.f32 %v228, %v533
    %v535 = vpop.f32.mrf.mxu0
    %536 = vmatprep.mubr.bf16.mxu0 0
    %537 = vmatmul.mubr.bf16.gmra.mxu0 %v383
    %v538 = vpop.f32.mrf.mxu0
    %v539 = vadd.f32 %v233, %v538
    %v540 = vpop.f32.mrf.mxu0
    %v541 = vpop.f32.mrf.mxu0
    %v542 = vadd.f32 %v238, %v541
    %v543 = vpop.f32.mrf.mxu0
    %544 = vmatprep.mubr.bf16.mxu0 0
    %545 = vmatmul.mubr.bf16.gmra.mxu0 %v386
    %v546 = vpop.f32.mrf.mxu0
    %v547 = vadd.f32 %v243, %v546
    %v548 = vpop.f32.mrf.mxu0
    %v549 = vpop.f32.mrf.mxu0
    %v550 = vadd.f32 %v248, %v549
    %v551 = vpop.f32.mrf.mxu0
    %552 = vdwg.mxu0
    %v553 = vmax.f32 %v427, 0.0
    %v554 = vmax.f32 %v430, 0.0
    %v555 = vmax.f32 %v435, 0.0
    %v556 = vmax.f32 %v438, 0.0
    %v557 = vmax.f32 %v443, 0.0
    %v558 = vmax.f32 %v446, 0.0
    %v559 = vmax.f32 %v451, 0.0
    %v560 = vmax.f32 %v454, 0.0
    %v561 = vmax.f32 %v459, 0.0
    %v562 = vmax.f32 %v462, 0.0
    %v563 = vmax.f32 %v467, 0.0
    %v564 = vmax.f32 %v470, 0.0
    %v565 = vmax.f32 %v475, 0.0
    %v566 = vmax.f32 %v478, 0.0
    %v567 = vmax.f32 %v483, 0.0
    %v568 = vmax.f32 %v486, 0.0
    %v569 = vmax.f32 %v491, 0.0
    %v570 = vmax.f32 %v494, 0.0
    %v571 = vmax.f32 %v499, 0.0
    %v572 = vmax.f32 %v502, 0.0
    %v573 = vmax.f32 %v507, 0.0
    %v574 = vmax.f32 %v510, 0.0
    %v575 = vmax.f32 %v515, 0.0
    %v576 = vmax.f32 %v518, 0.0
    %v577 = vmax.f32 %v523, 0.0
    %v578 = vmax.f32 %v526, 0.0
    %v579 = vmax.f32 %v531, 0.0
    %v580 = vmax.f32 %v534, 0.0
    %v581 = vmax.f32 %v539, 0.0
    %v582 = vmax.f32 %v542, 0.0
    %v583 = vmax.f32 %v547, 0.0
    %v584 = vmax.f32 %v550, 0.0
    %v585 = vld [vmem:[%s3] sm:$0x3]
    %s586 = sld [smem:[#allocation2]]
    %v587 = vstv %s586
    %v589 = vlaneseq
    %v590 = vshrl.u32 %v589, 7
    %v591 = vsub.s32 0, %v590
    %v592 = vrot.slane %v585, %v591
    %v593 = vlaneseq
    %v594 = vshrl.u32 %v593, 7
    %v595 = vsub.s32 1, %v594
    %v596 = vrot.slane %v585, %v595
    %599 = vmatprep.subr.mxu0 0.0
    %600 = vmatpush1.msra.mxu0 %v568
    %601 = vmatprep.subr.mxu0 0.0
    %602 = vmatpush1.msra.mxu0 %v567
    %603 = vmatprep.subr.mxu0 0.0
    %604 = vmatpush1.msra.mxu0 %v566
    %605 = vmatprep.subr.mxu0 0.0
    %606 = vmatpush1.msra.mxu0 %v565
    %607 = vmatprep.subr.mxu0 0.0
    %608 = vmatpush1.msra.mxu0 %v564
    %609 = vmatprep.subr.mxu0 0.0
    %610 = vmatpush1.msra.mxu0 %v563
    %611 = vmatprep.subr.mxu0 0.0
    %612 = vmatpush1.msra.mxu0 %v562
    %613 = vmatprep.subr.mxu0 0.0
    %614 = vmatpush1.msra.mxu0 %v561
    %615 = vmatprep.subr.mxu0 0.0
    %616 = vmatpush1.msra.mxu0 %v560
    %617 = vmatprep.subr.mxu0 0.0
    %618 = vmatpush1.msra.mxu0 %v559
    %619 = vmatprep.subr.mxu0 0.0
    %620 = vmatpush1.msra.mxu0 %v558
    %621 = vmatprep.subr.mxu0 0.0
    %622 = vmatpush1.msra.mxu0 %v557
    %623 = vmatprep.subr.mxu0 0.0
    %624 = vmatpush1.msra.mxu0 %v556
    %625 = vmatprep.subr.mxu0 0.0
    %626 = vmatpush1.msra.mxu0 %v555
    %627 = vmatprep.subr.mxu0 0.0
    %628 = vmatpush1.msra.mxu0 %v554
    %629 = vmatprep.subr.mxu0 0.0
    %630 = vmatpush1.msra.mxu0 %v553
    %631 = vmatprep.subr.mxu0 0.0
    %632 = vmatpush2.msra.mxu0 %v584
    %633 = vmatprep.subr.mxu0 0.0
    %634 = vmatpush2.msra.mxu0 %v583
    %635 = vmatprep.subr.mxu0 0.0
    %636 = vmatpush2.msra.mxu0 %v582
    %637 = vmatprep.subr.mxu0 0.0
    %638 = vmatpush2.msra.mxu0 %v581
    %639 = vmatprep.subr.mxu0 0.0
    %640 = vmatpush2.msra.mxu0 %v580
    %641 = vmatprep.subr.mxu0 0.0
    %642 = vmatpush2.msra.mxu0 %v579
    %643 = vmatprep.subr.mxu0 0.0
    %644 = vmatpush2.msra.mxu0 %v578
    %645 = vmatprep.subr.mxu0 0.0
    %646 = vmatpush2.msra.mxu0 %v577
    %647 = vmatprep.subr.mxu0 0.0
    %648 = vmatpush2.msra.mxu0 %v576
    %649 = vmatprep.subr.mxu0 0.0
    %650 = vmatpush2.msra.mxu0 %v575
    %651 = vmatprep.subr.mxu0 0.0
    %652 = vmatpush2.msra.mxu0 %v574
    %653 = vmatprep.subr.mxu0 0.0
    %654 = vmatpush2.msra.mxu0 %v573
    %655 = vmatprep.subr.mxu0 0.0
    %656 = vmatpush2.msra.mxu0 %v572
    %657 = vmatprep.subr.mxu0 0.0
    %658 = vmatpush2.msra.mxu0 %v571
    %659 = vmatprep.subr.mxu0 0.0
    %660 = vmatpush2.msra.mxu0 %v570
    %661 = vmatprep.subr.mxu0 0.0
    %662 = vmatpush2.msra.mxu0 %v569
    %663 = vmatprep.mubr.f32.mxu0 %v596
    %664 = vmatmul.mubr.f32.gmra.mxu0 %v592
    %v665 = vpop.f32.mrf.mxu0
    %v666 = vadd.f32 %v587, %v665
    %v667 = vpop.f32.mrf.mxu0
    %668 = vdwg.mxu0
    %vm669 = vcmask 57344
    %670 = vst.msk [vmem:[#allocation3] sm:$0x1] %vm669, %v666
    // Predicated region
    $region22: #{tpu_custom_call.1} parent=1 // pred_check
      _
    $region23: #{tpu_custom_call.1} parent=1 // pred_check_branch
      %672 = sbr.rel (0) target = $region25
    $region24: #{tpu_custom_call.1} parent=1 // pred_region
      %s674 = ssub.s32 16, 16
      %675 = vsyncadd [#allocation4], %s674
      %s677 = sshll.u32 [#allocation3], 4
      %s678 = int_to_ptr.vmem [resolvable:$true] %s677
      %680 = dma.vmem_to_hbm [thread:$0]  %s678, 16, %s5, [#allocation4]
    $region25: #{tpu_custom_call.1} parent=1 // pred_fallthru
      _
    // Predicated region
    $region26: #{tpu_custom_call.1} parent=1 // pred_check
      _
    $region27: #{tpu_custom_call.1} parent=1 // pred_check_branch
      %682 = sbr.rel (0) target = $region29
    $region28: #{tpu_custom_call.1} parent=1 // pred_region
      %683 = dma.done [#allocation4], 16
    $region29: #{tpu_custom_call.1} parent=1 // pred_fallthru
      _
    %684 = vsyncpa [#allocation4], 1

</llo_original>
